<compile_context>
chip_gen: v6e
topology: v6e:2x2x1
jax: 0.10.0
libtpu: 0.0.40
codegen_flags: <defaults>
</compile_context>

<pallas_src>
import functools

import jax
import jax.numpy as jnp
from jax.experimental import pallas as pl
from jax.experimental.pallas import tpu as pltpu

LN_EPS = 1e-5  # PyTorch nn.LayerNorm default eps


def _round_up(n, m):
    return -(-n // m) * m


def _row_tile_cap():
    """512-row tiles by default; cap at 256 on v5e (1 vst slot, smaller scoped VMEM)."""
    try:
        kind = jax.devices()[0].device_kind.lower()
    except Exception:
        return 512
    if "v5 lite" in kind or "v5lite" in kind or "v5e" in kind:
        return 256
    return 512


def _pick_tm(m, cap):
    """Largest sublane-aligned row tile <= cap that still yields >= 2 grid steps
    whenever M allows it (so the 'parallel' row axis can shard across v7x's two
    TensorCores and the pipeline has something to overlap)."""
    half = _round_up(-(-m // 2), 8)     # ceil(M/2) rounded up to a sublane multiple
    return max(8, min(cap, half))


def _fused_mlp_kernel(x_ref, mask_ref,
                      w1_ref, b1_ref, g1_ref, bt1_ref,
                      w2_ref, b2_ref, g2_ref, bt2_ref,
                      w3_ref, b3_ref, g3_ref, bt3_ref,
                      o_ref, *, f1_true, f2_true, f3_true):
    """One row tile of: 3x [ y = x@W + b ; y *= mask_col ; LayerNorm ; sigmoid ].
    Padded weight columns/rows and padded bias/gamma/beta are zero, so padded
    output columns of (dot + bias + mask) are exactly zero and LN sums over the
    padded width equal sums over the true width."""
    rows = mask_ref.shape[0]
    mask = mask_ref[...]                                  # (TM, 1) f32, loaded once
    f1p = w1_ref.shape[1]
    f2p = w2_ref.shape[1]
    # Hoisted lane-broadcasts (JAX does not CSE broadcast_in_dim). Layers 1 and 3
    # share the same padded width, so two broadcasts cover all three sublayers.
    mask_w1 = jnp.broadcast_to(mask, (rows, f1p))
    mask_w2 = jnp.broadcast_to(mask, (rows, f2p))

    def sublayer(x_bf16, w_ref, b_ref, g_ref, bt_ref, mask_b, f_true, out_dtype):
        # MXU matmul in bf16, f32 accumulate.
        y = jnp.dot(x_bf16, w_ref[...], preferred_element_type=jnp.float32)
        y = (y + b_ref[...]) * mask_b                     # padded cols stay exactly 0
        fpad = y.shape[-1]
        inv_n = 1.0 / float(f_true)
        # LayerNorm statistics over the TRUE feature width only.
        mean = jnp.sum(y, axis=-1, keepdims=True) * inv_n
        centered = y - mean
        if f_true != fpad:                                # skip mask when lane-aligned
            col_ok = jax.lax.broadcasted_iota(jnp.int32, (1, fpad), 1) < f_true
            centered = jnp.where(col_ok, centered, 0.0)
        var = jnp.sum(centered * centered, axis=-1, keepdims=True) * inv_n
        y_hat = centered * jax.lax.rsqrt(var + LN_EPS) * g_ref[...] + bt_ref[...]
        # sigmoid(z) = 0.5*tanh(0.5*z) + 0.5  -> single EUP push per element.
        return (0.5 * jnp.tanh(0.5 * y_hat) + 0.5).astype(out_dtype)

    # Intermediates h1/h2 are produced directly in bf16 (they feed the next MXU
    # matmul anyway); only the final layer is materialized in the output dtype.
    h1 = sublayer(x_ref[...].astype(jnp.bfloat16), w1_ref, b1_ref, g1_ref, bt1_ref,
                  mask_w1, f1_true, jnp.bfloat16)
    h2 = sublayer(h1, w2_ref, b2_ref, g2_ref, bt2_ref, mask_w2, f2_true, jnp.bfloat16)
    h3 = sublayer(h2, w3_ref, b3_ref, g3_ref, bt3_ref, mask_w1, f3_true, o_ref.dtype)
    o_ref[...] = h3
    # TODO(synk): nn.Dropout is treated as identity (inference mode); training-mode
    # stochastic dropout would use pltpu.prng_seed + pltpu.prng_random_bits.
    # TODO(synk): for very large d_model (weights > ~VMEM/2 on v7x's 64 MiB) add a
    # K/N-tiled fallback for the 2*d_model-wide layer with an f32 accumulator
    # instead of keeping all three weights fully VMEM-resident.


def init_params(key, feature_size, d_model):
    """nn.Linear / nn.LayerNorm parameters. Weights stored transposed
    (in_features, out_features), zero-padded so every output width is a multiple
    of 128 lanes, and pre-cast to bf16 once (no per-call HBM cast pass).
    gamma/beta are zero in the padded columns."""
    f0 = feature_size
    f1, f2, f3 = d_model, 2 * d_model, d_model
    f1p, f2p, f3p = (_round_up(f, 128) for f in (f1, f2, f3))
    dims = [(f0, f1, f0, f1p), (f1, f2, f1p, f2p), (f2, f3, f2p, f3p)]
    params = []
    for (fin, fout, fin_p, fout_p) in dims:
        key, kw, kb = jax.random.split(key, 3)
        bound = float(fin) ** -0.5
        w = jax.random.uniform(kw, (fin, fout), jnp.float32, -bound, bound)
        b = jax.random.uniform(kb, (1, fout), jnp.float32, -bound, bound)
        w = (jnp.zeros((fin_p, fout_p), jnp.float32)
             .at[:fin, :fout].set(w).astype(jnp.bfloat16))
        b = jnp.zeros((1, fout_p), jnp.float32).at[:, :fout].set(b)
        gamma = jnp.zeros((1, fout_p), jnp.float32).at[:, :fout].set(1.0)
        beta = jnp.zeros((1, fout_p), jnp.float32)
        params.append((w, b, gamma, beta))
    return params


def mlp_0_forward(data, mask, params, d_model):
    """data: (B, S, feature_size) f32; mask: (B, S, K) f32 (only mask[:,:,0] used,
    matching MLP_0.mask_resize)."""
    B, S, F0 = data.shape
    M = B * S
    x = data.reshape(M, F0)                                # stays f32; cast in-kernel
    mask_col = mask[:, :, 0].reshape(M, 1).astype(jnp.float32)

    (w1, b1, g1, bt1), (w2, b2, g2, bt2), (w3, b3, g3, bt3) = params
    f1p, f2p, f3p = w1.shape[1], w2.shape[1], w3.shape[1]

    tm = _pick_tm(M, _row_tile_cap())
    grid = (pl.cdiv(M, tm),)                               # ragged last block is fine

    row = lambda i: (i, 0)                                 # row-tiled blocks
    # Whole-array VMEM residency: single copy, NOT double-buffered (weights never
    # change across the row grid).
    resident = pl.BlockSpec(memory_space=pltpu.MemorySpace.VMEM)

    kernel = functools.partial(_fused_mlp_kernel,
                               f1_true=d_model, f2_true=2 * d_model, f3_true=d_model)

    # Size the scoped VMEM limit from the real footprint (single-buffered params,
    # double-buffered row tiles, f32 LN temporaries) with generous headroom.
    param_bytes = sum(int(a.size) * a.dtype.itemsize
                      for layer in params for a in layer)
    io_bytes = 2 * (tm * F0 * 4 + tm * 4 + tm * f3p * 4)
    live_bytes = 4 * tm * max(f1p, f2p) * 4
    vmem_limit = int(min(128 << 20,
                         max(32 << 20, 2 * (param_bytes + io_bytes + live_bytes))))

    out = pl.pallas_call(
        kernel,
        out_shape=jax.ShapeDtypeStruct((M, f3p), jnp.float32),
        grid=grid,
        in_specs=[
            pl.BlockSpec((tm, F0), row),                   # x tile (f32)
            pl.BlockSpec((tm, 1), row),                    # mask column
            resident, resident, resident, resident,        # layer 1 params
            resident, resident, resident, resident,        # layer 2 params
            resident, resident, resident, resident,        # layer 3 params
        ],
        out_specs=pl.BlockSpec((tm, f3p), row),            # lane-dense (multiple of 128)
        compiler_params=pltpu.CompilerParams(
            dimension_semantics=("parallel",),             # shard rows across TCs (v7x)
            vmem_limit_bytes=vmem_limit),
    )(x, mask_col, w1, b1, g1, bt1, w2, b2, g2, bt2, w3, b3, g3, bt3)

    if f3p != d_model:                                     # skip slice when lane-aligned
        out = out[:, :d_model]
    return out.reshape(B, S, d_model)


if __name__ == "__main__":
    B, S = 2, 8
    feature_size, d_model = 16, 32
    dropout = 0.1  # unused at inference

    key = jax.random.PRNGKey(0)
    key, k_data, k_mask, k_params = jax.random.split(key, 4)

    data = jax.random.normal(k_data, (B, S, feature_size), jnp.float32)
    # binary padding mask, shape (B, S, feature_size); only column 0 is used
    mask = (jax.random.uniform(k_mask, (B, S, feature_size)) > 0.2).astype(jnp.float32)

    params = init_params(k_params, feature_size, d_model)

    fwd = jax.jit(mlp_0_forward, static_argnames=("d_model",))
    out = fwd(data, mask, params, d_model=d_model)
    jax.block_until_ready(out)
    assert out.shape == (B, S, d_model)
    print("KERNEL_OK")
</pallas_src>

<mosaic_0001>
module attributes {stable_mosaic.version = 11 : i64} {
  func.func @_fused_mlp_kernel(%arg0: i32, %arg1: memref<8x16xf32, #tpu.memory_space<vmem>>, %arg2: memref<8x1xf32, #tpu.memory_space<vmem>>, %arg3: memref<16x128xbf16, #tpu.memory_space<vmem>>, %arg4: memref<1x128xf32, #tpu.memory_space<vmem>>, %arg5: memref<1x128xf32, #tpu.memory_space<vmem>>, %arg6: memref<1x128xf32, #tpu.memory_space<vmem>>, %arg7: memref<128x128xbf16, #tpu.memory_space<vmem>>, %arg8: memref<1x128xf32, #tpu.memory_space<vmem>>, %arg9: memref<1x128xf32, #tpu.memory_space<vmem>>, %arg10: memref<1x128xf32, #tpu.memory_space<vmem>>, %arg11: memref<128x128xbf16, #tpu.memory_space<vmem>>, %arg12: memref<1x128xf32, #tpu.memory_space<vmem>>, %arg13: memref<1x128xf32, #tpu.memory_space<vmem>>, %arg14: memref<1x128xf32, #tpu.memory_space<vmem>>, %arg15: memref<8x128xf32, #tpu.memory_space<vmem>>) attributes {dimension_semantics = [#tpu.dimension_semantics<parallel>], iteration_bounds = array<i64: 2>, scalar_prefetch = 0 : i64, scratch_operands = 0 : i64, tpu.core_type = #tpu.core_type<tc>, window_params = [{transform_indices = @transform_0, window_bounds = array<i64: 8, 16>}, {transform_indices = @transform_1, window_bounds = array<i64: 8, 1>}, {pipeline_mode = #tpu.pipeline_mode<synchronous>, transform_indices = @transform_2, window_bounds = array<i64: 16, 128>}, {pipeline_mode = #tpu.pipeline_mode<synchronous>, transform_indices = @transform_3, window_bounds = array<i64: 1, 128>}, {pipeline_mode = #tpu.pipeline_mode<synchronous>, transform_indices = @transform_4, window_bounds = array<i64: 1, 128>}, {pipeline_mode = #tpu.pipeline_mode<synchronous>, transform_indices = @transform_5, window_bounds = array<i64: 1, 128>}, {pipeline_mode = #tpu.pipeline_mode<synchronous>, transform_indices = @transform_6, window_bounds = array<i64: 128, 128>}, {pipeline_mode = #tpu.pipeline_mode<synchronous>, transform_indices = @transform_7, window_bounds = array<i64: 1, 128>}, {pipeline_mode = #tpu.pipeline_mode<synchronous>, transform_indices = @transform_8, window_bounds = array<i64: 1, 128>}, {pipeline_mode = #tpu.pipeline_mode<synchronous>, transform_indices = @transform_9, window_bounds = array<i64: 1, 128>}, {pipeline_mode = #tpu.pipeline_mode<synchronous>, transform_indices = @transform_10, window_bounds = array<i64: 128, 128>}, {pipeline_mode = #tpu.pipeline_mode<synchronous>, transform_indices = @transform_11, window_bounds = array<i64: 1, 128>}, {pipeline_mode = #tpu.pipeline_mode<synchronous>, transform_indices = @transform_12, window_bounds = array<i64: 1, 128>}, {pipeline_mode = #tpu.pipeline_mode<synchronous>, transform_indices = @transform_13, window_bounds = array<i64: 1, 128>}, {transform_indices = @transform_14, window_bounds = array<i64: 8, 128>}]} {
    %c0 = arith.constant 0 : index
    %c0_0 = arith.constant 0 : index
    %0 = vector.load %arg2[%c0, %c0_0] : memref<8x1xf32, #tpu.memory_space<vmem>>, vector<8x1xf32>
    %1 = vector.shape_cast %0 : vector<8x1xf32> to vector<8x1xf32>
    %2 = vector.broadcast %1 : vector<8x1xf32> to vector<8x128xf32>
    %3 = vector.shape_cast %0 : vector<8x1xf32> to vector<8x1xf32>
    %4 = vector.broadcast %3 : vector<8x1xf32> to vector<8x128xf32>
    %c0_1 = arith.constant 0 : index
    %c0_2 = arith.constant 0 : index
    %5 = vector.load %arg1[%c0_1, %c0_2] : memref<8x16xf32, #tpu.memory_space<vmem>>, vector<8x16xf32>
    %6 = arith.truncf %5 : vector<8x16xf32> to vector<8x16xbf16>
    %c0_3 = arith.constant 0 : index
    %c0_4 = arith.constant 0 : index
    %7 = vector.load %arg3[%c0_3, %c0_4] : memref<16x128xbf16, #tpu.memory_space<vmem>>, vector<16x128xbf16>
    %cst = arith.constant dense<0.000000e+00> : vector<8x128xf32>
    %8 = tpu.matmul %6, %7, %cst {dimension_numbers = #tpu.dot_dimension_numbers<[1], [0], [0], [1], [0, 0, 1, 1], [], []>} : vector<8x16xbf16>, vector<16x128xbf16>, vector<8x128xf32> -> vector<8x128xf32>
    %c0_5 = arith.constant 0 : index
    %c0_6 = arith.constant 0 : index
    %9 = vector.load %arg4[%c0_5, %c0_6] : memref<1x128xf32, #tpu.memory_space<vmem>>, vector<1x128xf32>
    %10 = vector.broadcast %9 : vector<1x128xf32> to vector<8x128xf32>
    %11 = arith.addf %8, %10 : vector<8x128xf32>
    %12 = arith.mulf %11, %2 : vector<8x128xf32>
    %cst_7 = arith.constant dense<0.000000e+00> : vector<8xf32>
    %13 = vector.multi_reduction <add>, %12, %cst_7 [1] : vector<8x128xf32> to vector<8xf32>
    %14 = vector.shape_cast %13 : vector<8xf32> to vector<8x1xf32>
    %cst_8 = arith.constant 3.125000e-02 : f32
    %15 = vector.broadcast %cst_8 : f32 to vector<8x1xf32>
    %16 = arith.mulf %14, %15 : vector<8x1xf32>
    %17 = vector.broadcast %16 : vector<8x1xf32> to vector<8x128xf32>
    %18 = arith.subf %12, %17 : vector<8x128xf32>
    %19 = tpu.iota {dimensions = array<i32: 1>} : vector<1x128xi32>
    %c32_i32 = arith.constant 32 : i32
    %20 = vector.broadcast %c32_i32 : i32 to vector<1x128xi32>
    %21 = arith.cmpi slt, %19, %20 : vector<1x128xi32>
    %cst_9 = arith.constant 0.000000e+00 : f32
    %22 = vector.shape_cast %21 : vector<1x128xi1> to vector<1x128xi1>
    %23 = vector.broadcast %22 : vector<1x128xi1> to vector<8x128xi1>
    %24 = vector.broadcast %cst_9 : f32 to vector<8x128xf32>
    %25 = arith.select %23, %18, %24 : vector<8x128xi1>, vector<8x128xf32>
    %26 = arith.mulf %25, %25 : vector<8x128xf32>
    %cst_10 = arith.constant dense<0.000000e+00> : vector<8xf32>
    %27 = vector.multi_reduction <add>, %26, %cst_10 [1] : vector<8x128xf32> to vector<8xf32>
    %28 = vector.shape_cast %27 : vector<8xf32> to vector<8x1xf32>
    %cst_11 = arith.constant 3.125000e-02 : f32
    %29 = vector.broadcast %cst_11 : f32 to vector<8x1xf32>
    %30 = arith.mulf %28, %29 : vector<8x1xf32>
    %cst_12 = arith.constant 9.99999974E-6 : f32
    %31 = vector.broadcast %cst_12 : f32 to vector<8x1xf32>
    %32 = arith.addf %30, %31 : vector<8x1xf32>
    %33 = math.rsqrt %32 : vector<8x1xf32>
    %34 = vector.broadcast %33 : vector<8x1xf32> to vector<8x128xf32>
    %35 = arith.mulf %25, %34 : vector<8x128xf32>
    %c0_13 = arith.constant 0 : index
    %c0_14 = arith.constant 0 : index
    %36 = vector.load %arg5[%c0_13, %c0_14] : memref<1x128xf32, #tpu.memory_space<vmem>>, vector<1x128xf32>
    %37 = vector.broadcast %36 : vector<1x128xf32> to vector<8x128xf32>
    %38 = arith.mulf %35, %37 : vector<8x128xf32>
    %c0_15 = arith.constant 0 : index
    %c0_16 = arith.constant 0 : index
    %39 = vector.load %arg6[%c0_15, %c0_16] : memref<1x128xf32, #tpu.memory_space<vmem>>, vector<1x128xf32>
    %40 = vector.broadcast %39 : vector<1x128xf32> to vector<8x128xf32>
    %41 = arith.addf %38, %40 : vector<8x128xf32>
    %cst_17 = arith.constant 5.000000e-01 : f32
    %42 = vector.broadcast %cst_17 : f32 to vector<8x128xf32>
    %43 = arith.mulf %42, %41 : vector<8x128xf32>
    %44 = math.tanh %43 : vector<8x128xf32>
    %cst_18 = arith.constant 5.000000e-01 : f32
    %45 = vector.broadcast %cst_18 : f32 to vector<8x128xf32>
    %46 = arith.mulf %45, %44 : vector<8x128xf32>
    %cst_19 = arith.constant 5.000000e-01 : f32
    %47 = vector.broadcast %cst_19 : f32 to vector<8x128xf32>
    %48 = arith.addf %46, %47 : vector<8x128xf32>
    %49 = arith.truncf %48 : vector<8x128xf32> to vector<8x128xbf16>
    %c0_20 = arith.constant 0 : index
    %c0_21 = arith.constant 0 : index
    %50 = vector.load %arg7[%c0_20, %c0_21] : memref<128x128xbf16, #tpu.memory_space<vmem>>, vector<128x128xbf16>
    %cst_22 = arith.constant dense<0.000000e+00> : vector<8x128xf32>
    %51 = tpu.matmul %49, %50, %cst_22 {dimension_numbers = #tpu.dot_dimension_numbers<[1], [0], [0], [1], [0, 0, 1, 1], [], []>} : vector<8x128xbf16>, vector<128x128xbf16>, vector<8x128xf32> -> vector<8x128xf32>
    %c0_23 = arith.constant 0 : index
    %c0_24 = arith.constant 0 : index
    %52 = vector.load %arg8[%c0_23, %c0_24] : memref<1x128xf32, #tpu.memory_space<vmem>>, vector<1x128xf32>
    %53 = vector.broadcast %52 : vector<1x128xf32> to vector<8x128xf32>
    %54 = arith.addf %51, %53 : vector<8x128xf32>
    %55 = arith.mulf %54, %4 : vector<8x128xf32>
    %cst_25 = arith.constant dense<0.000000e+00> : vector<8xf32>
    %56 = vector.multi_reduction <add>, %55, %cst_25 [1] : vector<8x128xf32> to vector<8xf32>
    %57 = vector.shape_cast %56 : vector<8xf32> to vector<8x1xf32>
    %cst_26 = arith.constant 1.562500e-02 : f32
    %58 = vector.broadcast %cst_26 : f32 to vector<8x1xf32>
    %59 = arith.mulf %57, %58 : vector<8x1xf32>
    %60 = vector.broadcast %59 : vector<8x1xf32> to vector<8x128xf32>
    %61 = arith.subf %55, %60 : vector<8x128xf32>
    %62 = tpu.iota {dimensions = array<i32: 1>} : vector<1x128xi32>
    %c64_i32 = arith.constant 64 : i32
    %63 = vector.broadcast %c64_i32 : i32 to vector<1x128xi32>
    %64 = arith.cmpi slt, %62, %63 : vector<1x128xi32>
    %cst_27 = arith.constant 0.000000e+00 : f32
    %65 = vector.shape_cast %64 : vector<1x128xi1> to vector<1x128xi1>
    %66 = vector.broadcast %65 : vector<1x128xi1> to vector<8x128xi1>
    %67 = vector.broadcast %cst_27 : f32 to vector<8x128xf32>
    %68 = arith.select %66, %61, %67 : vector<8x128xi1>, vector<8x128xf32>
    %69 = arith.mulf %68, %68 : vector<8x128xf32>
    %cst_28 = arith.constant dense<0.000000e+00> : vector<8xf32>
    %70 = vector.multi_reduction <add>, %69, %cst_28 [1] : vector<8x128xf32> to vector<8xf32>
    %71 = vector.shape_cast %70 : vector<8xf32> to vector<8x1xf32>
    %cst_29 = arith.constant 1.562500e-02 : f32
    %72 = vector.broadcast %cst_29 : f32 to vector<8x1xf32>
    %73 = arith.mulf %71, %72 : vector<8x1xf32>
    %cst_30 = arith.constant 9.99999974E-6 : f32
    %74 = vector.broadcast %cst_30 : f32 to vector<8x1xf32>
    %75 = arith.addf %73, %74 : vector<8x1xf32>
    %76 = math.rsqrt %75 : vector<8x1xf32>
    %77 = vector.broadcast %76 : vector<8x1xf32> to vector<8x128xf32>
    %78 = arith.mulf %68, %77 : vector<8x128xf32>
    %c0_31 = arith.constant 0 : index
    %c0_32 = arith.constant 0 : index
    %79 = vector.load %arg9[%c0_31, %c0_32] : memref<1x128xf32, #tpu.memory_space<vmem>>, vector<1x128xf32>
    %80 = vector.broadcast %79 : vector<1x128xf32> to vector<8x128xf32>
    %81 = arith.mulf %78, %80 : vector<8x128xf32>
    %c0_33 = arith.constant 0 : index
    %c0_34 = arith.constant 0 : index
    %82 = vector.load %arg10[%c0_33, %c0_34] : memref<1x128xf32, #tpu.memory_space<vmem>>, vector<1x128xf32>
    %83 = vector.broadcast %82 : vector<1x128xf32> to vector<8x128xf32>
    %84 = arith.addf %81, %83 : vector<8x128xf32>
    %cst_35 = arith.constant 5.000000e-01 : f32
    %85 = vector.broadcast %cst_35 : f32 to vector<8x128xf32>
    %86 = arith.mulf %85, %84 : vector<8x128xf32>
    %87 = math.tanh %86 : vector<8x128xf32>
    %cst_36 = arith.constant 5.000000e-01 : f32
    %88 = vector.broadcast %cst_36 : f32 to vector<8x128xf32>
    %89 = arith.mulf %88, %87 : vector<8x128xf32>
    %cst_37 = arith.constant 5.000000e-01 : f32
    %90 = vector.broadcast %cst_37 : f32 to vector<8x128xf32>
    %91 = arith.addf %89, %90 : vector<8x128xf32>
    %92 = arith.truncf %91 : vector<8x128xf32> to vector<8x128xbf16>
    %c0_38 = arith.constant 0 : index
    %c0_39 = arith.constant 0 : index
    %93 = vector.load %arg11[%c0_38, %c0_39] : memref<128x128xbf16, #tpu.memory_space<vmem>>, vector<128x128xbf16>
    %cst_40 = arith.constant dense<0.000000e+00> : vector<8x128xf32>
    %94 = tpu.matmul %92, %93, %cst_40 {dimension_numbers = #tpu.dot_dimension_numbers<[1], [0], [0], [1], [0, 0, 1, 1], [], []>} : vector<8x128xbf16>, vector<128x128xbf16>, vector<8x128xf32> -> vector<8x128xf32>
    %c0_41 = arith.constant 0 : index
    %c0_42 = arith.constant 0 : index
    %95 = vector.load %arg12[%c0_41, %c0_42] : memref<1x128xf32, #tpu.memory_space<vmem>>, vector<1x128xf32>
    %96 = vector.broadcast %95 : vector<1x128xf32> to vector<8x128xf32>
    %97 = arith.addf %94, %96 : vector<8x128xf32>
    %98 = arith.mulf %97, %2 : vector<8x128xf32>
    %cst_43 = arith.constant dense<0.000000e+00> : vector<8xf32>
    %99 = vector.multi_reduction <add>, %98, %cst_43 [1] : vector<8x128xf32> to vector<8xf32>
    %100 = vector.shape_cast %99 : vector<8xf32> to vector<8x1xf32>
    %cst_44 = arith.constant 3.125000e-02 : f32
    %101 = vector.broadcast %cst_44 : f32 to vector<8x1xf32>
    %102 = arith.mulf %100, %101 : vector<8x1xf32>
    %103 = vector.broadcast %102 : vector<8x1xf32> to vector<8x128xf32>
    %104 = arith.subf %98, %103 : vector<8x128xf32>
    %105 = tpu.iota {dimensions = array<i32: 1>} : vector<1x128xi32>
    %c32_i32_45 = arith.constant 32 : i32
    %106 = vector.broadcast %c32_i32_45 : i32 to vector<1x128xi32>
    %107 = arith.cmpi slt, %105, %106 : vector<1x128xi32>
    %cst_46 = arith.constant 0.000000e+00 : f32
    %108 = vector.shape_cast %107 : vector<1x128xi1> to vector<1x128xi1>
    %109 = vector.broadcast %108 : vector<1x128xi1> to vector<8x128xi1>
    %110 = vector.broadcast %cst_46 : f32 to vector<8x128xf32>
    %111 = arith.select %109, %104, %110 : vector<8x128xi1>, vector<8x128xf32>
    %112 = arith.mulf %111, %111 : vector<8x128xf32>
    %cst_47 = arith.constant dense<0.000000e+00> : vector<8xf32>
    %113 = vector.multi_reduction <add>, %112, %cst_47 [1] : vector<8x128xf32> to vector<8xf32>
    %114 = vector.shape_cast %113 : vector<8xf32> to vector<8x1xf32>
    %cst_48 = arith.constant 3.125000e-02 : f32
    %115 = vector.broadcast %cst_48 : f32 to vector<8x1xf32>
    %116 = arith.mulf %114, %115 : vector<8x1xf32>
    %cst_49 = arith.constant 9.99999974E-6 : f32
    %117 = vector.broadcast %cst_49 : f32 to vector<8x1xf32>
    %118 = arith.addf %116, %117 : vector<8x1xf32>
    %119 = math.rsqrt %118 : vector<8x1xf32>
    %120 = vector.broadcast %119 : vector<8x1xf32> to vector<8x128xf32>
    %121 = arith.mulf %111, %120 : vector<8x128xf32>
    %c0_50 = arith.constant 0 : index
    %c0_51 = arith.constant 0 : index
    %122 = vector.load %arg13[%c0_50, %c0_51] : memref<1x128xf32, #tpu.memory_space<vmem>>, vector<1x128xf32>
    %123 = vector.broadcast %122 : vector<1x128xf32> to vector<8x128xf32>
    %124 = arith.mulf %121, %123 : vector<8x128xf32>
    %c0_52 = arith.constant 0 : index
    %c0_53 = arith.constant 0 : index
    %125 = vector.load %arg14[%c0_52, %c0_53] : memref<1x128xf32, #tpu.memory_space<vmem>>, vector<1x128xf32>
    %126 = vector.broadcast %125 : vector<1x128xf32> to vector<8x128xf32>
    %127 = arith.addf %124, %126 : vector<8x128xf32>
    %cst_54 = arith.constant 5.000000e-01 : f32
    %128 = vector.broadcast %cst_54 : f32 to vector<8x128xf32>
    %129 = arith.mulf %128, %127 : vector<8x128xf32>
    %130 = math.tanh %129 : vector<8x128xf32>
    %cst_55 = arith.constant 5.000000e-01 : f32
    %131 = vector.broadcast %cst_55 : f32 to vector<8x128xf32>
    %132 = arith.mulf %131, %130 : vector<8x128xf32>
    %cst_56 = arith.constant 5.000000e-01 : f32
    %133 = vector.broadcast %cst_56 : f32 to vector<8x128xf32>
    %134 = arith.addf %132, %133 : vector<8x128xf32>
    %c0_57 = arith.constant 0 : index
    %c0_58 = arith.constant 0 : index
    %135 = vector.load %arg15[%c0_57, %c0_58] : memref<8x128xf32, #tpu.memory_space<vmem>>, vector<8x128xf32>
    tpu.vector_store %arg15[%c0_57, %c0_58], %134 {strides = array<i32>} : memref<8x128xf32, #tpu.memory_space<vmem>>, vector<8x128xf32>,
    return
  }
  func.func @transform_0(%arg0: i32) -> (i32, i32) {
    %c0_i32 = arith.constant 0 : i32
    %c0_i32_0 = arith.constant 0 : i32
    return %arg0, %c0_i32 : i32, i32
  }
  func.func @transform_1(%arg0: i32) -> (i32, i32) {
    %c0_i32 = arith.constant 0 : i32
    %c0_i32_0 = arith.constant 0 : i32
    return %arg0, %c0_i32 : i32, i32
  }
  func.func @transform_2(%arg0: i32) -> (i32, i32) {
    %c0_i32 = arith.constant 0 : i32
    %c0_i32_0 = arith.constant 0 : i32
    %c0_i32_1 = arith.constant 0 : i32
    return %c0_i32, %c0_i32_0 : i32, i32
  }
  func.func @transform_3(%arg0: i32) -> (i32, i32) {
    %c0_i32 = arith.constant 0 : i32
    %c0_i32_0 = arith.constant 0 : i32
    %c0_i32_1 = arith.constant 0 : i32
    return %c0_i32, %c0_i32_0 : i32, i32
  }
  func.func @transform_4(%arg0: i32) -> (i32, i32) {
    %c0_i32 = arith.constant 0 : i32
    %c0_i32_0 = arith.constant 0 : i32
    %c0_i32_1 = arith.constant 0 : i32
    return %c0_i32, %c0_i32_0 : i32, i32
  }
  func.func @transform_5(%arg0: i32) -> (i32, i32) {
    %c0_i32 = arith.constant 0 : i32
    %c0_i32_0 = arith.constant 0 : i32
    %c0_i32_1 = arith.constant 0 : i32
    return %c0_i32, %c0_i32_0 : i32, i32
  }
  func.func @transform_6(%arg0: i32) -> (i32, i32) {
    %c0_i32 = arith.constant 0 : i32
    %c0_i32_0 = arith.constant 0 : i32
    %c0_i32_1 = arith.constant 0 : i32
    return %c0_i32, %c0_i32_0 : i32, i32
  }
  func.func @transform_7(%arg0: i32) -> (i32, i32) {
    %c0_i32 = arith.constant 0 : i32
    %c0_i32_0 = arith.constant 0 : i32
    %c0_i32_1 = arith.constant 0 : i32
    return %c0_i32, %c0_i32_0 : i32, i32
  }
  func.func @transform_8(%arg0: i32) -> (i32, i32) {
    %c0_i32 = arith.constant 0 : i32
    %c0_i32_0 = arith.constant 0 : i32
    %c0_i32_1 = arith.constant 0 : i32
    return %c0_i32, %c0_i32_0 : i32, i32
  }
  func.func @transform_9(%arg0: i32) -> (i32, i32) {
    %c0_i32 = arith.constant 0 : i32
    %c0_i32_0 = arith.constant 0 : i32
    %c0_i32_1 = arith.constant 0 : i32
    return %c0_i32, %c0_i32_0 : i32, i32
  }
  func.func @transform_10(%arg0: i32) -> (i32, i32) {
    %c0_i32 = arith.constant 0 : i32
    %c0_i32_0 = arith.constant 0 : i32
    %c0_i32_1 = arith.constant 0 : i32
    return %c0_i32, %c0_i32_0 : i32, i32
  }
  func.func @transform_11(%arg0: i32) -> (i32, i32) {
    %c0_i32 = arith.constant 0 : i32
    %c0_i32_0 = arith.constant 0 : i32
    %c0_i32_1 = arith.constant 0 : i32
    return %c0_i32, %c0_i32_0 : i32, i32
  }
  func.func @transform_12(%arg0: i32) -> (i32, i32) {
    %c0_i32 = arith.constant 0 : i32
    %c0_i32_0 = arith.constant 0 : i32
    %c0_i32_1 = arith.constant 0 : i32
    return %c0_i32, %c0_i32_0 : i32, i32
  }
  func.func @transform_13(%arg0: i32) -> (i32, i32) {
    %c0_i32 = arith.constant 0 : i32
    %c0_i32_0 = arith.constant 0 : i32
    %c0_i32_1 = arith.constant 0 : i32
    return %c0_i32, %c0_i32_0 : i32, i32
  }
  func.func @transform_14(%arg0: i32) -> (i32, i32) {
    %c0_i32 = arith.constant 0 : i32
    %c0_i32_0 = arith.constant 0 : i32
    return %arg0, %c0_i32 : i32, i32
  }
}

</mosaic_0001>

<llo_original>
// kernel: mlp_0_forward.1
$region0: #{mlp_0_forward.1}
  #allocation0 [shape = 'u32[]', space=smem, size = 0x4, offset = 0x4, fixed_abs, tag = 'smem constant byte address 0x4 - core index']
  #allocation1 [shape = 'u32[144,128]{1,0:T(1,128)}', space=vmem, size = 0x12000, scoped, tag = 'internal scratch']
  %s0 = inlined_call_operand.vmem [shape: f32[16,16], index: 0, kind: input, shape index: {}]
  %s1 = inlined_call_operand.vmem [shape: f32[16,1], index: 1, kind: input, shape index: {}]
  %s2 = inlined_call_operand.vmem [shape: bf16[16,128], index: 2, kind: input, shape index: {}]
  %s3 = inlined_call_operand.vmem [shape: f32[1,128], index: 3, kind: input, shape index: {}]
  %s4 = inlined_call_operand.vmem [shape: f32[1,128], index: 4, kind: input, shape index: {}]
  %s5 = inlined_call_operand.vmem [shape: f32[1,128], index: 5, kind: input, shape index: {}]
  %s6 = inlined_call_operand.hbm [shape: bf16[128,128], index: 6, kind: input, shape index: {}]
  %s7 = inlined_call_operand.vmem [shape: f32[1,128], index: 7, kind: input, shape index: {}]
  %s8 = inlined_call_operand.vmem [shape: f32[1,128], index: 8, kind: input, shape index: {}]
  %s9 = inlined_call_operand.vmem [shape: f32[1,128], index: 9, kind: input, shape index: {}]
  %s10 = inlined_call_operand.hbm [shape: bf16[128,128], index: 10, kind: input, shape index: {}]
  %s11 = inlined_call_operand.vmem [shape: f32[1,128], index: 11, kind: input, shape index: {}]
  %s12 = inlined_call_operand.vmem [shape: f32[1,128], index: 12, kind: input, shape index: {}]
  %s13 = inlined_call_operand.vmem [shape: f32[1,128], index: 13, kind: input, shape index: {}]
  %s14 = inlined_call_operand.vmem [shape: f32[16,128], index: 14, kind: output, shape index: {}]
  %s15 = sld [smem:[#allocation0]]
  $region97: #{mlp_0_forward.1} parent=0
    _
  %s17 = ssub.s32 1, %s15
  %s18 = scalar_select 0, %s17, %s15
  $region1: #{mlp_0_forward.1} parent=0
    #allocation2 [shape = 'u8[32768]{0}', space=vmem, size = 0x8000, scoped, tag = 'input window, operand 6, single buffered']
    #allocation3 [shape = 's32[2]{0}', space=sflag, size = 0x8, scoped, tag = 'scoped memory for mlp_0_forward.1']
    #allocation4 [shape = 'u8[32768]{0}', space=vmem, size = 0x8000, scoped, tag = 'input window, operand 10, single buffered']
    #allocation5 [shape = 's32[1]{0}', space=sflag, size = 0x4, scoped, tag = 'scoped memory for mlp_0_forward.1']
    %19 = vsyncpa [#allocation3], 0
    %20 = vsyncpa [#allocation5], 0
    loop: start=0, step=1, limit=4
    $region2: #{mlp_0_forward.1} parent=1 // loop_pre_header
      _
    $region3: #{mlp_0_forward.1} parent=1 // loop_header
      %s22 = sphi 0, %s26
      %p23 = scmp.ge.s32.totalorder %s22, 4
      %s32 = sphi 0, %s34
      %s35 = sphi 0, %s32
      %s36 = sphi 0, %s35
      %s52 = sphi 0, %s36
      %s58 = sphi 0, %s60
      %s61 = sphi 0, %s58
      %s62 = sphi 0, %s61
      %s78 = sphi 0, %s62
      %s82 = sphi 0, %s82
      %s84 = sphi 0, %s82
      %s85 = sphi 0, %s84
      %s99 = sphi 0, %s85
      %s103 = sphi 0, %s103
      %s105 = sphi 0, %s103
      %s106 = sphi 0, %s105
      %s120 = sphi 0, %s106
      %s124 = sphi 0, %s124
      %s126 = sphi 0, %s124
      %s127 = sphi 0, %s126
      %s141 = sphi 0, %s127
      %s145 = sphi 0, %s145
      %s147 = sphi 0, %s145
      %s148 = sphi 0, %s147
      %s162 = sphi 0, %s148
      %s166 = sphi 0, %s166
      %s168 = sphi 0, %s166
      %s169 = sphi 0, %s168
      %s183 = sphi 0, %s169
      %s187 = sphi 0, %s187
      %s189 = sphi 0, %s187
      %s190 = sphi 0, %s189
      %s204 = sphi 0, %s190
      %s208 = sphi 0, %s208
      %s210 = sphi 0, %s208
      %s211 = sphi 0, %s210
      %s225 = sphi 0, %s211
      %s229 = sphi 0, %s229
      %s231 = sphi 0, %s229
      %s232 = sphi 0, %s231
      %s246 = sphi 0, %s232
      %s250 = sphi 0, %s250
      %s252 = sphi 0, %s250
      %s253 = sphi 0, %s252
      %s267 = sphi 0, %s253
      %s271 = sphi 0, %s271
      %s273 = sphi 0, %s271
      %s274 = sphi 0, %s273
      %s288 = sphi 0, %s274
      %s292 = sphi 0, %s292
      %s294 = sphi 0, %s292
      %s295 = sphi 0, %s294
      %s309 = sphi 0, %s295
      %s313 = sphi 0, %s313
      %s315 = sphi 0, %s313
      %s316 = sphi 0, %s315
      %s330 = sphi 0, %s316
      %s336 = sphi 0, %s338
      %s339 = sphi 0, %s336
      %s340 = sphi 0, %s339
      %s356 = sphi 0, %s340
    $region4: #{mlp_0_forward.1} parent=1 // loop_header_branch
      %25 = sbr.rel (%p23) target = $region8
    $region5: #{mlp_0_forward.1} parent=1 // loop_body
      %s27 = ssub.s32 %s22, 1
      %s28 = ssub.s32 %s22, 2
      %s29 = sadd.s32 %s22, 1
      %s30 = ssub.s32 %s22, %s29
      %p31 = scmp.eq.s32.totalorder %s30, 0
      %s33 = sadd.s32 %s32, 1
      %s34 = scalar_select %p31, %s32, %s33
      %p37 = pneg %p31
      %p38 = scmp.eq.s32.totalorder %s22, 1
      %p39 = por %p37, %p38
      %p40 = scmp.ne.s32.totalorder %s32, %s35
      %p41 = scmp.eq.s32.totalorder %s22, 0
      %p42 = por %p40, %p41
      %p43 = scmp.ne.s32.totalorder %s32, %s35
      %p44 = scmp.eq.s32.totalorder %s27, 1
      %p45 = por %p43, %p44
      %p46 = scmp.ne.s32.totalorder %s35, %s36
      %p47 = scmp.eq.s32.totalorder %s27, 0
      %p48 = por %p46, %p47
      %p49 = scmp.ne.s32.totalorder %s35, %s36
      %p50 = scmp.eq.s32.totalorder %s28, 1
      %p51 = por %p49, %p50
      %p53 = scmp.ne.s32.totalorder %s36, %s52
      %p54 = scmp.eq.s32.totalorder %s28, 0
      %p55 = por %p53, %p54
      %s56 = ssub.s32 %s22, %s29
      %p57 = scmp.eq.s32.totalorder %s56, 0
      %s59 = sadd.s32 %s58, 1
      %s60 = scalar_select %p57, %s58, %s59
      %p63 = pneg %p57
      %p64 = scmp.eq.s32.totalorder %s22, 1
      %p65 = por %p63, %p64
      %p66 = scmp.ne.s32.totalorder %s58, %s61
      %p67 = scmp.eq.s32.totalorder %s22, 0
      %p68 = por %p66, %p67
      %p69 = scmp.ne.s32.totalorder %s58, %s61
      %p70 = scmp.eq.s32.totalorder %s27, 1
      %p71 = por %p69, %p70
      %p72 = scmp.ne.s32.totalorder %s61, %s62
      %p73 = scmp.eq.s32.totalorder %s27, 0
      %p74 = por %p72, %p73
      %p75 = scmp.ne.s32.totalorder %s61, %s62
      %p76 = scmp.eq.s32.totalorder %s28, 1
      %p77 = por %p75, %p76
      %p79 = scmp.ne.s32.totalorder %s62, %s78
      %p80 = scmp.eq.s32.totalorder %s28, 0
      %p81 = por %p79, %p80
      %s83 = sadd.s32 %s82, 1
      %p86 = scmp.eq.s32.totalorder %s22, 1
      %p87 = scmp.ne.s32.totalorder %s82, %s84
      %p88 = scmp.eq.s32.totalorder %s22, 0
      %p89 = por %p87, %p88
      %p90 = scmp.ne.s32.totalorder %s82, %s84
      %p91 = scmp.eq.s32.totalorder %s27, 1
      %p92 = por %p90, %p91
      %p93 = scmp.ne.s32.totalorder %s84, %s85
      %p94 = scmp.eq.s32.totalorder %s27, 0
      %p95 = por %p93, %p94
      %p96 = scmp.ne.s32.totalorder %s84, %s85
      %p97 = scmp.eq.s32.totalorder %s28, 1
      %p98 = por %p96, %p97
      %p100 = scmp.ne.s32.totalorder %s85, %s99
      %p101 = scmp.eq.s32.totalorder %s28, 0
      %p102 = por %p100, %p101
      %s104 = sadd.s32 %s103, 1
      %p107 = scmp.eq.s32.totalorder %s22, 1
      %p108 = scmp.ne.s32.totalorder %s103, %s105
      %p109 = scmp.eq.s32.totalorder %s22, 0
      %p110 = por %p108, %p109
      %p111 = scmp.ne.s32.totalorder %s103, %s105
      %p112 = scmp.eq.s32.totalorder %s27, 1
      %p113 = por %p111, %p112
      %p114 = scmp.ne.s32.totalorder %s105, %s106
      %p115 = scmp.eq.s32.totalorder %s27, 0
      %p116 = por %p114, %p115
      %p117 = scmp.ne.s32.totalorder %s105, %s106
      %p118 = scmp.eq.s32.totalorder %s28, 1
      %p119 = por %p117, %p118
      %p121 = scmp.ne.s32.totalorder %s106, %s120
      %p122 = scmp.eq.s32.totalorder %s28, 0
      %p123 = por %p121, %p122
      %s125 = sadd.s32 %s124, 1
      %p128 = scmp.eq.s32.totalorder %s22, 1
      %p129 = scmp.ne.s32.totalorder %s124, %s126
      %p130 = scmp.eq.s32.totalorder %s22, 0
      %p131 = por %p129, %p130
      %p132 = scmp.ne.s32.totalorder %s124, %s126
      %p133 = scmp.eq.s32.totalorder %s27, 1
      %p134 = por %p132, %p133
      %p135 = scmp.ne.s32.totalorder %s126, %s127
      %p136 = scmp.eq.s32.totalorder %s27, 0
      %p137 = por %p135, %p136
      %p138 = scmp.ne.s32.totalorder %s126, %s127
      %p139 = scmp.eq.s32.totalorder %s28, 1
      %p140 = por %p138, %p139
      %p142 = scmp.ne.s32.totalorder %s127, %s141
      %p143 = scmp.eq.s32.totalorder %s28, 0
      %p144 = por %p142, %p143
      %s146 = sadd.s32 %s145, 1
      %p149 = scmp.eq.s32.totalorder %s22, 1
      %p150 = scmp.ne.s32.totalorder %s145, %s147
      %p151 = scmp.eq.s32.totalorder %s22, 0
      %p152 = por %p150, %p151
      %p153 = scmp.ne.s32.totalorder %s145, %s147
      %p154 = scmp.eq.s32.totalorder %s27, 1
      %p155 = por %p153, %p154
      %p156 = scmp.ne.s32.totalorder %s147, %s148
      %p157 = scmp.eq.s32.totalorder %s27, 0
      %p158 = por %p156, %p157
      %p159 = scmp.ne.s32.totalorder %s147, %s148
      %p160 = scmp.eq.s32.totalorder %s28, 1
      %p161 = por %p159, %p160
      %p163 = scmp.ne.s32.totalorder %s148, %s162
      %p164 = scmp.eq.s32.totalorder %s28, 0
      %p165 = por %p163, %p164
      %s167 = sadd.s32 %s166, 1
      %p170 = scmp.eq.s32.totalorder %s22, 1
      %p171 = scmp.ne.s32.totalorder %s166, %s168
      %p172 = scmp.eq.s32.totalorder %s22, 0
      %p173 = por %p171, %p172
      %p174 = scmp.ne.s32.totalorder %s166, %s168
      %p175 = scmp.eq.s32.totalorder %s27, 1
      %p176 = por %p174, %p175
      %p177 = scmp.ne.s32.totalorder %s168, %s169
      %p178 = scmp.eq.s32.totalorder %s27, 0
      %p179 = por %p177, %p178
      %p180 = scmp.ne.s32.totalorder %s168, %s169
      %p181 = scmp.eq.s32.totalorder %s28, 1
      %p182 = por %p180, %p181
      %p184 = scmp.ne.s32.totalorder %s169, %s183
      %p185 = scmp.eq.s32.totalorder %s28, 0
      %p186 = por %p184, %p185
      %s188 = sadd.s32 %s187, 1
      %p191 = scmp.eq.s32.totalorder %s22, 1
      %p192 = scmp.ne.s32.totalorder %s187, %s189
      %p193 = scmp.eq.s32.totalorder %s22, 0
      %p194 = por %p192, %p193
      %p195 = scmp.ne.s32.totalorder %s187, %s189
      %p196 = scmp.eq.s32.totalorder %s27, 1
      %p197 = por %p195, %p196
      %p198 = scmp.ne.s32.totalorder %s189, %s190
      %p199 = scmp.eq.s32.totalorder %s27, 0
      %p200 = por %p198, %p199
      %p201 = scmp.ne.s32.totalorder %s189, %s190
      %p202 = scmp.eq.s32.totalorder %s28, 1
      %p203 = por %p201, %p202
      %p205 = scmp.ne.s32.totalorder %s190, %s204
      %p206 = scmp.eq.s32.totalorder %s28, 0
      %p207 = por %p205, %p206
      %s209 = sadd.s32 %s208, 1
      %p212 = scmp.eq.s32.totalorder %s22, 1
      %p213 = scmp.ne.s32.totalorder %s208, %s210
      %p214 = scmp.eq.s32.totalorder %s22, 0
      %p215 = por %p213, %p214
      %p216 = scmp.ne.s32.totalorder %s208, %s210
      %p217 = scmp.eq.s32.totalorder %s27, 1
      %p218 = por %p216, %p217
      %p219 = scmp.ne.s32.totalorder %s210, %s211
      %p220 = scmp.eq.s32.totalorder %s27, 0
      %p221 = por %p219, %p220
      %p222 = scmp.ne.s32.totalorder %s210, %s211
      %p223 = scmp.eq.s32.totalorder %s28, 1
      %p224 = por %p222, %p223
      %p226 = scmp.ne.s32.totalorder %s211, %s225
      %p227 = scmp.eq.s32.totalorder %s28, 0
      %p228 = por %p226, %p227
      %s230 = sadd.s32 %s229, 1
      %p233 = scmp.eq.s32.totalorder %s22, 1
      %p234 = scmp.ne.s32.totalorder %s229, %s231
      %p235 = scmp.eq.s32.totalorder %s22, 0
      %p236 = por %p234, %p235
      %p237 = scmp.ne.s32.totalorder %s229, %s231
      %p238 = scmp.eq.s32.totalorder %s27, 1
      %p239 = por %p237, %p238
      %p240 = scmp.ne.s32.totalorder %s231, %s232
      %p241 = scmp.eq.s32.totalorder %s27, 0
      %p242 = por %p240, %p241
      %p243 = scmp.ne.s32.totalorder %s231, %s232
      %p244 = scmp.eq.s32.totalorder %s28, 1
      %p245 = por %p243, %p244
      %p247 = scmp.ne.s32.totalorder %s232, %s246
      %p248 = scmp.eq.s32.totalorder %s28, 0
      %p249 = por %p247, %p248
      %s251 = sadd.s32 %s250, 1
      %p254 = scmp.eq.s32.totalorder %s22, 1
      %p255 = scmp.ne.s32.totalorder %s250, %s252
      %p256 = scmp.eq.s32.totalorder %s22, 0
      %p257 = por %p255, %p256
      %p258 = scmp.ne.s32.totalorder %s250, %s252
      %p259 = scmp.eq.s32.totalorder %s27, 1
      %p260 = por %p258, %p259
      %p261 = scmp.ne.s32.totalorder %s252, %s253
      %p262 = scmp.eq.s32.totalorder %s27, 0
      %p263 = por %p261, %p262
      %p264 = scmp.ne.s32.totalorder %s252, %s253
      %p265 = scmp.eq.s32.totalorder %s28, 1
      %p266 = por %p264, %p265
      %p268 = scmp.ne.s32.totalorder %s253, %s267
      %p269 = scmp.eq.s32.totalorder %s28, 0
      %p270 = por %p268, %p269
      %s272 = sadd.s32 %s271, 1
      %p275 = scmp.eq.s32.totalorder %s22, 1
      %p276 = scmp.ne.s32.totalorder %s271, %s273
      %p277 = scmp.eq.s32.totalorder %s22, 0
      %p278 = por %p276, %p277
      %p279 = scmp.ne.s32.totalorder %s271, %s273
      %p280 = scmp.eq.s32.totalorder %s27, 1
      %p281 = por %p279, %p280
      %p282 = scmp.ne.s32.totalorder %s273, %s274
      %p283 = scmp.eq.s32.totalorder %s27, 0
      %p284 = por %p282, %p283
      %p285 = scmp.ne.s32.totalorder %s273, %s274
      %p286 = scmp.eq.s32.totalorder %s28, 1
      %p287 = por %p285, %p286
      %p289 = scmp.ne.s32.totalorder %s274, %s288
      %p290 = scmp.eq.s32.totalorder %s28, 0
      %p291 = por %p289, %p290
      %s293 = sadd.s32 %s292, 1
      %p296 = scmp.eq.s32.totalorder %s22, 1
      %p297 = scmp.ne.s32.totalorder %s292, %s294
      %p298 = scmp.eq.s32.totalorder %s22, 0
      %p299 = por %p297, %p298
      %p300 = scmp.ne.s32.totalorder %s292, %s294
      %p301 = scmp.eq.s32.totalorder %s27, 1
      %p302 = por %p300, %p301
      %p303 = scmp.ne.s32.totalorder %s294, %s295
      %p304 = scmp.eq.s32.totalorder %s27, 0
      %p305 = por %p303, %p304
      %p306 = scmp.ne.s32.totalorder %s294, %s295
      %p307 = scmp.eq.s32.totalorder %s28, 1
      %p308 = por %p306, %p307
      %p310 = scmp.ne.s32.totalorder %s295, %s309
      %p311 = scmp.eq.s32.totalorder %s28, 0
      %p312 = por %p310, %p311
      %s314 = sadd.s32 %s313, 1
      %p317 = scmp.eq.s32.totalorder %s22, 1
      %p318 = scmp.ne.s32.totalorder %s313, %s315
      %p319 = scmp.eq.s32.totalorder %s22, 0
      %p320 = por %p318, %p319
      %p321 = scmp.ne.s32.totalorder %s313, %s315
      %p322 = scmp.eq.s32.totalorder %s27, 1
      %p323 = por %p321, %p322
      %p324 = scmp.ne.s32.totalorder %s315, %s316
      %p325 = scmp.eq.s32.totalorder %s27, 0
      %p326 = por %p324, %p325
      %p327 = scmp.ne.s32.totalorder %s315, %s316
      %p328 = scmp.eq.s32.totalorder %s28, 1
      %p329 = por %p327, %p328
      %p331 = scmp.ne.s32.totalorder %s316, %s330
      %p332 = scmp.eq.s32.totalorder %s28, 0
      %p333 = por %p331, %p332
      %s334 = ssub.s32 %s22, %s29
      %p335 = scmp.eq.s32.totalorder %s334, 0
      %s337 = sadd.s32 %s336, 1
      %s338 = scalar_select %p335, %s336, %s337
      %p341 = pneg %p335
      %p342 = scmp.eq.s32.totalorder %s22, 1
      %p343 = por %p341, %p342
      %p344 = scmp.ne.s32.totalorder %s336, %s339
      %p345 = scmp.eq.s32.totalorder %s22, 0
      %p346 = por %p344, %p345
      %p347 = scmp.ne.s32.totalorder %s336, %s339
      %p348 = scmp.eq.s32.totalorder %s27, 1
      %p349 = por %p347, %p348
      %p350 = scmp.ne.s32.totalorder %s339, %s340
      %p351 = scmp.eq.s32.totalorder %s27, 0
      %p352 = por %p350, %p351
      %p353 = scmp.ne.s32.totalorder %s339, %s340
      %p354 = scmp.eq.s32.totalorder %s28, 1
      %p355 = por %p353, %p354
      %p357 = scmp.ne.s32.totalorder %s340, %s356
      %p358 = scmp.eq.s32.totalorder %s28, 0
      %p359 = por %p357, %p358
      %p360 = scmp.le.s32.totalorder 1, %s22
      %p361 = scmp.lt.s32.totalorder %s22, 3
      %p362 = pnand %p360, %p361
      %p363 = pneg %p362
      // Predicated region
      $region9: #{mlp_0_forward.1} parent=5 // pred_check
        _
      $region10: #{mlp_0_forward.1} parent=5 // pred_check_branch
        %365 = sbr.rel (%p362) target = $region12
      $region11: #{mlp_0_forward.1} parent=5 // pred_region
        %s366 = ssub.s32 %s22, 1
        // Predicated region
        $region13: #{mlp_0_forward.1} parent=11 // pred_check
          %p367 = pneg %p95
        $region14: #{mlp_0_forward.1} parent=11 // pred_check_branch
          %369 = sbr.rel (%p367) target = $region16
        $region15: #{mlp_0_forward.1} parent=11 // pred_region
          _
        $region16: #{mlp_0_forward.1} parent=11 // pred_fallthru
          _
        // Predicated region
        $region17: #{mlp_0_forward.1} parent=11 // pred_check
          %p370 = pneg %p116
        $region18: #{mlp_0_forward.1} parent=11 // pred_check_branch
          %372 = sbr.rel (%p370) target = $region20
        $region19: #{mlp_0_forward.1} parent=11 // pred_region
          _
        $region20: #{mlp_0_forward.1} parent=11 // pred_fallthru
          _
        // Predicated region
        $region21: #{mlp_0_forward.1} parent=11 // pred_check
          %p373 = pneg %p137
        $region22: #{mlp_0_forward.1} parent=11 // pred_check_branch
          %375 = sbr.rel (%p373) target = $region24
        $region23: #{mlp_0_forward.1} parent=11 // pred_region
          _
        $region24: #{mlp_0_forward.1} parent=11 // pred_fallthru
          _
        // Predicated region
        $region25: #{mlp_0_forward.1} parent=11 // pred_check
          %p376 = pneg %p158
        $region26: #{mlp_0_forward.1} parent=11 // pred_check_branch
          %378 = sbr.rel (%p376) target = $region28
        $region27: #{mlp_0_forward.1} parent=11 // pred_region
          _
        $region28: #{mlp_0_forward.1} parent=11 // pred_fallthru
          _
        // Predicated region
        $region29: #{mlp_0_forward.1} parent=11 // pred_check
          %p379 = pneg %p179
        $region30: #{mlp_0_forward.1} parent=11 // pred_check_branch
          %381 = sbr.rel (%p379) target = $region32
        $region31: #{mlp_0_forward.1} parent=11 // pred_region
          %s383 = ssub.s32 1024, 1024
          %384 = vsyncadd [#allocation3], %s383
          %s385 = sshll.u32 [#allocation2], 4
          %s386 = int_to_ptr.vmem [resolvable:$true] %s385
          %391 = dma.hbm_to_vmem [thread:$0]  %s6, 1024, %s386, [#allocation3], 64, 64, 4
        $region32: #{mlp_0_forward.1} parent=11 // pred_fallthru
          _
        // Predicated region
        $region33: #{mlp_0_forward.1} parent=11 // pred_check
          %p392 = pneg %p200
        $region34: #{mlp_0_forward.1} parent=11 // pred_check_branch
          %394 = sbr.rel (%p392) target = $region36
        $region35: #{mlp_0_forward.1} parent=11 // pred_region
          _
        $region36: #{mlp_0_forward.1} parent=11 // pred_fallthru
          _
        // Predicated region
        $region37: #{mlp_0_forward.1} parent=11 // pred_check
          %p395 = pneg %p221
        $region38: #{mlp_0_forward.1} parent=11 // pred_check_branch
          %397 = sbr.rel (%p395) target = $region40
        $region39: #{mlp_0_forward.1} parent=11 // pred_region
          _
        $region40: #{mlp_0_forward.1} parent=11 // pred_fallthru
          _
        // Predicated region
        $region41: #{mlp_0_forward.1} parent=11 // pred_check
          %p398 = pneg %p242
        $region42: #{mlp_0_forward.1} parent=11 // pred_check_branch
          %400 = sbr.rel (%p398) target = $region44
        $region43: #{mlp_0_forward.1} parent=11 // pred_region
          _
        $region44: #{mlp_0_forward.1} parent=11 // pred_fallthru
          _
        // Predicated region
        $region45: #{mlp_0_forward.1} parent=11 // pred_check
          %p401 = pneg %p263
        $region46: #{mlp_0_forward.1} parent=11 // pred_check_branch
          %403 = sbr.rel (%p401) target = $region48
        $region47: #{mlp_0_forward.1} parent=11 // pred_region
          %s405 = ssub.s32 1024, 1024
          %406 = vsyncadd [#allocation5], %s405
          %s407 = sshll.u32 [#allocation4], 4
          %s408 = int_to_ptr.vmem [resolvable:$true] %s407
          %413 = dma.hbm_to_vmem [thread:$0]  %s10, 1024, %s408, [#allocation5], 64, 64, 4
        $region48: #{mlp_0_forward.1} parent=11 // pred_fallthru
          _
        // Predicated region
        $region49: #{mlp_0_forward.1} parent=11 // pred_check
          %p414 = pneg %p284
        $region50: #{mlp_0_forward.1} parent=11 // pred_check_branch
          %416 = sbr.rel (%p414) target = $region52
        $region51: #{mlp_0_forward.1} parent=11 // pred_region
          _
        $region52: #{mlp_0_forward.1} parent=11 // pred_fallthru
          _
        // Predicated region
        $region53: #{mlp_0_forward.1} parent=11 // pred_check
          %p417 = pneg %p305
        $region54: #{mlp_0_forward.1} parent=11 // pred_check_branch
          %419 = sbr.rel (%p417) target = $region56
        $region55: #{mlp_0_forward.1} parent=11 // pred_region
          _
        $region56: #{mlp_0_forward.1} parent=11 // pred_fallthru
          _
        // Predicated region
        $region57: #{mlp_0_forward.1} parent=11 // pred_check
          %p420 = pneg %p326
        $region58: #{mlp_0_forward.1} parent=11 // pred_check_branch
          %422 = sbr.rel (%p420) target = $region60
        $region59: #{mlp_0_forward.1} parent=11 // pred_region
          _
        $region60: #{mlp_0_forward.1} parent=11 // pred_fallthru
          _
      $region12: #{mlp_0_forward.1} parent=5 // pred_fallthru
        _
      %p423 = scmp.lt.s32.totalorder %s22, 2
      // Predicated region
      $region61: #{mlp_0_forward.1} parent=5 // pred_check
        %p424 = pneg %p423
      $region62: #{mlp_0_forward.1} parent=5 // pred_check_branch
        %426 = sbr.rel (%p424) target = $region64
      $region63: #{mlp_0_forward.1} parent=5 // pred_region
        // Predicated region
        $region65: #{mlp_0_forward.1} parent=63 // pred_check
          %p427 = pneg %p42
        $region66: #{mlp_0_forward.1} parent=63 // pred_check_branch
          %429 = sbr.rel (%p427) target = $region68
        $region67: #{mlp_0_forward.1} parent=63 // pred_region
          %p430 = scmp.lt.s32.totalorder %s22, 1
          %s431 = scalar_select %p430, %s22, 1
          %s432 = smul.addr %s431, 8
          %s433 = scalar_lea.vmem %s0, %s432
        $region68: #{mlp_0_forward.1} parent=63 // pred_fallthru
          _
        // Predicated region
        $region69: #{mlp_0_forward.1} parent=63 // pred_check
          %p434 = pneg %p68
        $region70: #{mlp_0_forward.1} parent=63 // pred_check_branch
          %436 = sbr.rel (%p434) target = $region72
        $region71: #{mlp_0_forward.1} parent=63 // pred_region
          %p437 = scmp.lt.s32.totalorder %s22, 1
          %s438 = scalar_select %p437, %s22, 1
          %s439 = smul.addr %s438, 8
          %s440 = scalar_lea.vmem %s1, %s439
        $region72: #{mlp_0_forward.1} parent=63 // pred_fallthru
          _
      $region64: #{mlp_0_forward.1} parent=5 // pred_fallthru
        _
      %p441 = scmp.le.s32.totalorder 1, %s22
      %p442 = scmp.lt.s32.totalorder %s22, 3
      %p443 = pnand %p441, %p442
      %p444 = pneg %p443
      // Predicated region
      $region73: #{mlp_0_forward.1} parent=5 // pred_check
        _
      $region74: #{mlp_0_forward.1} parent=5 // pred_check_branch
        %446 = sbr.rel (%p443) target = $region76
      $region75: #{mlp_0_forward.1} parent=5 // pred_region
        %s447 = ssub.s32 %s22, 1
        // Predicated region
        $region77: #{mlp_0_forward.1} parent=75 // pred_check
          %p448 = pneg %p179
        $region78: #{mlp_0_forward.1} parent=75 // pred_check_branch
          %450 = sbr.rel (%p448) target = $region80
        $region79: #{mlp_0_forward.1} parent=75 // pred_region
          %451 = dma.done [#allocation3], 1024
        $region80: #{mlp_0_forward.1} parent=75 // pred_fallthru
          _
        // Predicated region
        $region81: #{mlp_0_forward.1} parent=75 // pred_check
          %p452 = pneg %p263
        $region82: #{mlp_0_forward.1} parent=75 // pred_check_branch
          %454 = sbr.rel (%p452) target = $region84
        $region83: #{mlp_0_forward.1} parent=75 // pred_region
          %455 = dma.done [#allocation5], 1024
        $region84: #{mlp_0_forward.1} parent=75 // pred_fallthru
          _
        %p456 = scmp.lt.s32.totalorder %s27, 1
        %s457 = scalar_select %p456, %s27, 1
        %s458 = smul.addr %s457, 8
        %s459 = scalar_lea.vmem %s0, %s458
        %p460 = pneg %p48
        %p461 = pneg %p45
        %p462 = scmp.lt.s32.totalorder %s27, 1
        %s463 = scalar_select %p462, %s27, 1
        %s464 = smul.addr %s463, 8
        %s465 = scalar_lea.vmem %s1, %s464
        %p466 = pneg %p74
        %p467 = pneg %p71
        %p468 = pneg %p95
        %p469 = pneg %p92
        %p470 = pneg %p116
        %p471 = pneg %p113
        %p472 = pneg %p137
        %p473 = pneg %p134
        %p474 = pneg %p158
        %p475 = pneg %p155
        %p476 = pneg %p179
        %p477 = pneg %p176
        %p478 = pneg %p200
        %p479 = pneg %p197
        %p480 = pneg %p221
        %p481 = pneg %p218
        %p482 = pneg %p242
        %p483 = pneg %p239
        %p484 = pneg %p263
        %p485 = pneg %p260
        %p486 = pneg %p284
        %p487 = pneg %p281
        %p488 = pneg %p305
        %p489 = pneg %p302
        %p490 = pneg %p326
        %p491 = pneg %p323
        %p492 = pneg %p352
        %p493 = pneg %p349
        %p494 = scmp.lt.s32.totalorder %s27, 1
        %s495 = scalar_select %p494, %s27, 1
        %s496 = smul.addr %s495, 8
        %s497 = scalar_lea.vmem %s14, %s496
        %p498 = scmp.lt.s32.totalorder %s27, 1
        %s499 = scalar_select %p498, %s27, 1
        %s500 = smul.addr %s499, 8
        %s501 = scalar_lea.vmem %s0, %s500
        %p502 = scmp.lt.s32.totalorder %s27, 1
        %s503 = scalar_select %p502, %s27, 1
        %s504 = smul.addr %s503, 8
        %s505 = scalar_lea.vmem %s1, %s504
        %p506 = scmp.lt.s32.totalorder %s27, 1
        %s507 = scalar_select %p506, %s27, 1
        %s508 = smul.addr %s507, 8
        %s509 = scalar_lea.vmem %s14, %s508
        %v511 = vld [vmem:[%s505] sm:$0xff]
        %513 = vset.pattern.permute.xlu0 0
        %514 = vperm.xlu0 %513, %v511
        %v515 = vpop.permute.xlu0 %514
        %v517 = vld [vmem:[%s501] sm:$0xff]
        %v518 = vpack.c.bf16 %v517, %v517
        %v519 = vld [vmem:[%s2] sm:$0xf]
        %v520 = vld [vmem:[%s2 + $0x4] sm:$0xf]
        %v521 = vld [vmem:[%s3] sm:$0x1]
        %v523 = vlaneseq
        %v524 = vshrl.u32 %v523, 7
        %v525 = vsub.s32 0, %v524
        %v526 = vrot.slane %v521, %v525
        %v530 = vunpack.c.l.b16 %v519
        %v531 = vunpack.c.l.b16 %v520
        %v532 = vpack.c.b16 %v531, %v530
        %vm534 = vcmask 130048
        %v536 = vsel %vm534, %v518, 0
        %538 = vmatprep.subr.bf16.mxu0 0
        %539 = vmatpush1.bf16.msra.mxu0 0
        %540 = vmatprep.subr.bf16.mxu0 0
        %541 = vmatpush1.bf16.msra.mxu0 0
        %542 = vmatprep.subr.bf16.mxu0 0
        %543 = vmatpush1.bf16.msra.mxu0 0
        %544 = vmatprep.subr.bf16.mxu0 0
        %545 = vmatpush1.bf16.msra.mxu0 0
        %546 = vmatprep.subr.bf16.mxu0 0
        %547 = vmatpush1.bf16.msra.mxu0 0
        %548 = vmatprep.subr.bf16.mxu0 0
        %549 = vmatpush1.bf16.msra.mxu0 0
        %550 = vmatprep.subr.bf16.mxu0 0
        %551 = vmatpush1.bf16.msra.mxu0 0
        %552 = vmatprep.subr.bf16.mxu0 0
        %553 = vmatpush1.bf16.msra.mxu0 %v532
        %554 = vmatprep.subr.bf16.mxu0 0
        %555 = vmatpush2.bf16.msra.mxu0 0
        %556 = vmatprep.subr.bf16.mxu0 0
        %557 = vmatpush2.bf16.msra.mxu0 0
        %558 = vmatprep.subr.bf16.mxu0 0
        %559 = vmatpush2.bf16.msra.mxu0 0
        %560 = vmatprep.subr.bf16.mxu0 0
        %561 = vmatpush2.bf16.msra.mxu0 0
        %562 = vmatprep.subr.bf16.mxu0 0
        %563 = vmatpush2.bf16.msra.mxu0 0
        %564 = vmatprep.subr.bf16.mxu0 0
        %565 = vmatpush2.bf16.msra.mxu0 0
        %566 = vmatprep.subr.bf16.mxu0 0
        %567 = vmatpush2.bf16.msra.mxu0 0
        %568 = vmatprep.subr.bf16.mxu0 0
        %569 = vmatpush2.bf16.msra.mxu0 0
        %570 = vmatprep.mubr.bf16.mxu0 0
        %571 = vmatmul.mubr.bf16.gmra.mxu0 %v536
        %v572 = vpop.f32.mrf.mxu0
        %v573 = vadd.f32 %v526, %v572
        %v574 = vpop.f32.mrf.mxu0
        %v575 = vpop.f32.mrf.mxu0
        %v576 = vpop.f32.mrf.mxu0
        %577 = vdwg.mxu0
        %v578 = vmul.f32 %v573, %v515
        %579 = vadd.xlane.f32.xlu0 %v578
        %v580 = vpop.xlane.xlu0 %579
        %v581 = vmul.f32 %v580, 0.03125
        %v582 = vsub.f32 %v578, %v581
        %v583 = vlaneseq
        %v584 = vand.u32 %v583, 127
        %vm585 = vcmp.lt.s32.totalorder %v584, 32
        %v586 = vsel %vm585, 1, 0
        %vm587 = vcmp.eq.s32.totalorder %v586, 1
        %v588 = vsel %vm587, %v582, 0.0
        %v589 = vmul.f32 %v588, %v588
        %590 = vadd.xlane.f32.xlu0 %v589
        %v591 = vpop.xlane.xlu0 %590
        %v592 = vmul.f32 %v591, 0.03125
        %v593 = vadd.f32 %v592, 1e-05
        %v594 = vrsqrt.pop %v593
        %v595 = vmul.f32 %v588, %v594
        %v596 = vld [vmem:[%s4] sm:$0x1]
        %v598 = vlaneseq
        %v599 = vshrl.u32 %v598, 7
        %v600 = vsub.s32 0, %v599
        %v601 = vrot.slane %v596, %v600
        %v603 = vmul.f32 %v595, %v601
        %v604 = vld [vmem:[%s5] sm:$0x1]
        %v606 = vlaneseq
        %v607 = vshrl.u32 %v606, 7
        %v608 = vsub.s32 0, %v607
        %v609 = vrot.slane %v604, %v608
        %v611 = vadd.f32 %v603, %v609
        %v612 = vmul.f32 %v611, 0.5
        %v613 = vtanh.pop %v612
        %v614 = vmul.f32 %v613, 0.5
        %v615 = vadd.f32 %v614, 0.5
        %v616 = vpack.c.bf16 %v615, %v615
        %v617 = vld [vmem:[#allocation2] sm:$0xf]
        %v618 = vld [vmem:[#allocation2 + $0x4] sm:$0xf]
        %v619 = vld [vmem:[#allocation2 + $0x8] sm:$0xf]
        %v620 = vld [vmem:[#allocation2 + $0xc] sm:$0xf]
        %v621 = vld [vmem:[#allocation2 + $0x10] sm:$0xf]
        %v622 = vld [vmem:[#allocation2 + $0x14] sm:$0xf]
        %v623 = vld [vmem:[#allocation2 + $0x18] sm:$0xf]
        %v624 = vld [vmem:[#allocation2 + $0x1c] sm:$0xf]
        %v625 = vld [vmem:[#allocation2 + $0x20] sm:$0xf]
        %v626 = vld [vmem:[#allocation2 + $0x24] sm:$0xf]
        %v627 = vld [vmem:[#allocation2 + $0x28] sm:$0xf]
        %v628 = vld [vmem:[#allocation2 + $0x2c] sm:$0xf]
        %v629 = vld [vmem:[#allocation2 + $0x30] sm:$0xf]
        %v630 = vld [vmem:[#allocation2 + $0x34] sm:$0xf]
        %v631 = vld [vmem:[#allocation2 + $0x38] sm:$0xf]
        %v632 = vld [vmem:[#allocation2 + $0x3c] sm:$0xf]
        %v633 = vld [vmem:[%s7] sm:$0x1]
        %v635 = vlaneseq
        %v636 = vshrl.u32 %v635, 7
        %v637 = vsub.s32 0, %v636
        %v638 = vrot.slane %v633, %v637
        %v656 = vunpack.c.l.b16 %v617
        %v657 = vunpack.c.l.b16 %v618
        %v658 = vunpack.c.l.b16 %v619
        %v659 = vunpack.c.l.b16 %v620
        %v660 = vunpack.c.l.b16 %v621
        %v661 = vunpack.c.l.b16 %v622
        %v662 = vunpack.c.l.b16 %v623
        %v663 = vunpack.c.l.b16 %v624
        %v664 = vunpack.c.l.b16 %v625
        %v665 = vunpack.c.l.b16 %v626
        %v666 = vunpack.c.l.b16 %v627
        %v667 = vunpack.c.l.b16 %v628
        %v668 = vunpack.c.l.b16 %v629
        %v669 = vunpack.c.l.b16 %v630
        %v670 = vunpack.c.l.b16 %v631
        %v671 = vunpack.c.l.b16 %v632
        %v672 = vpack.c.b16 %v657, %v656
        %v673 = vpack.c.b16 %v659, %v658
        %v674 = vpack.c.b16 %v661, %v660
        %v675 = vpack.c.b16 %v663, %v662
        %v676 = vpack.c.b16 %v665, %v664
        %v677 = vpack.c.b16 %v667, %v666
        %v678 = vpack.c.b16 %v669, %v668
        %v679 = vpack.c.b16 %v671, %v670
        %688 = vmatprep.subr.bf16.mxu0 0
        %689 = vmatpush1.bf16.msra.mxu0 %v679
        %690 = vmatprep.subr.bf16.mxu0 0
        %691 = vmatpush1.bf16.msra.mxu0 %v678
        %692 = vmatprep.subr.bf16.mxu0 0
        %693 = vmatpush1.bf16.msra.mxu0 %v677
        %694 = vmatprep.subr.bf16.mxu0 0
        %695 = vmatpush1.bf16.msra.mxu0 %v676
        %696 = vmatprep.subr.bf16.mxu0 0
        %697 = vmatpush1.bf16.msra.mxu0 %v675
        %698 = vmatprep.subr.bf16.mxu0 0
        %699 = vmatpush1.bf16.msra.mxu0 %v674
        %700 = vmatprep.subr.bf16.mxu0 0
        %701 = vmatpush1.bf16.msra.mxu0 %v673
        %702 = vmatprep.subr.bf16.mxu0 0
        %703 = vmatpush1.bf16.msra.mxu0 %v672
        %704 = vmatprep.subr.bf16.mxu0 0
        %705 = vmatpush2.bf16.msra.mxu0 0
        %706 = vmatprep.subr.bf16.mxu0 0
        %707 = vmatpush2.bf16.msra.mxu0 0
        %708 = vmatprep.subr.bf16.mxu0 0
        %709 = vmatpush2.bf16.msra.mxu0 0
        %710 = vmatprep.subr.bf16.mxu0 0
        %711 = vmatpush2.bf16.msra.mxu0 0
        %712 = vmatprep.subr.bf16.mxu0 0
        %713 = vmatpush2.bf16.msra.mxu0 0
        %714 = vmatprep.subr.bf16.mxu0 0
        %715 = vmatpush2.bf16.msra.mxu0 0
        %716 = vmatprep.subr.bf16.mxu0 0
        %717 = vmatpush2.bf16.msra.mxu0 0
        %718 = vmatprep.subr.bf16.mxu0 0
        %719 = vmatpush2.bf16.msra.mxu0 0
        %720 = vmatprep.mubr.bf16.mxu0 0
        %721 = vmatmul.mubr.bf16.gmra.mxu0 %v616
        %v722 = vpop.f32.mrf.mxu0
        %v723 = vadd.f32 %v638, %v722
        %v724 = vpop.f32.mrf.mxu0
        %v725 = vpop.f32.mrf.mxu0
        %v726 = vpop.f32.mrf.mxu0
        %727 = vdwg.mxu0
        %v728 = vmul.f32 %v723, %v515
        %729 = vadd.xlane.f32.xlu0 %v728
        %v730 = vpop.xlane.xlu0 %729
        %v731 = vmul.f32 %v730, 0.015625
        %v732 = vsub.f32 %v728, %v731
        %vm733 = vcmp.lt.s32.totalorder %v584, 64
        %v734 = vsel %vm733, 1, 0
        %vm735 = vcmp.eq.s32.totalorder %v734, 1
        %v736 = vsel %vm735, %v732, 0.0
        %v737 = vmul.f32 %v736, %v736
        %738 = vadd.xlane.f32.xlu0 %v737
        %v739 = vpop.xlane.xlu0 %738
        %v740 = vmul.f32 %v739, 0.015625
        %v741 = vadd.f32 %v740, 1e-05
        %v742 = vrsqrt.pop %v741
        %v743 = vmul.f32 %v736, %v742
        %v744 = vld [vmem:[%s8] sm:$0x1]
        %v746 = vlaneseq
        %v747 = vshrl.u32 %v746, 7
        %v748 = vsub.s32 0, %v747
        %v749 = vrot.slane %v744, %v748
        %v751 = vmul.f32 %v743, %v749
        %v752 = vld [vmem:[%s9] sm:$0x1]
        %v754 = vlaneseq
        %v755 = vshrl.u32 %v754, 7
        %v756 = vsub.s32 0, %v755
        %v757 = vrot.slane %v752, %v756
        %v759 = vadd.f32 %v751, %v757
        %v760 = vmul.f32 %v759, 0.5
        %v761 = vtanh.pop %v760
        %v762 = vmul.f32 %v761, 0.5
        %v763 = vadd.f32 %v762, 0.5
        %v764 = vpack.c.bf16 %v763, %v763
        %v765 = vld [vmem:[#allocation4] sm:$0xf]
        %v766 = vld [vmem:[#allocation4 + $0x4] sm:$0xf]
        %v767 = vld [vmem:[#allocation4 + $0x8] sm:$0xf]
        %v768 = vld [vmem:[#allocation4 + $0xc] sm:$0xf]
        %v769 = vld [vmem:[#allocation4 + $0x10] sm:$0xf]
        %v770 = vld [vmem:[#allocation4 + $0x14] sm:$0xf]
        %v771 = vld [vmem:[#allocation4 + $0x18] sm:$0xf]
        %v772 = vld [vmem:[#allocation4 + $0x1c] sm:$0xf]
        %v773 = vld [vmem:[#allocation4 + $0x20] sm:$0xf]
        %v774 = vld [vmem:[#allocation4 + $0x24] sm:$0xf]
        %v775 = vld [vmem:[#allocation4 + $0x28] sm:$0xf]
        %v776 = vld [vmem:[#allocation4 + $0x2c] sm:$0xf]
        %v777 = vld [vmem:[#allocation4 + $0x30] sm:$0xf]
        %v778 = vld [vmem:[#allocation4 + $0x34] sm:$0xf]
        %v779 = vld [vmem:[#allocation4 + $0x38] sm:$0xf]
        %v780 = vld [vmem:[#allocation4 + $0x3c] sm:$0xf]
        %v781 = vld [vmem:[%s11] sm:$0x1]
        %v783 = vlaneseq
        %v784 = vshrl.u32 %v783, 7
        %v785 = vsub.s32 0, %v784
        %v786 = vrot.slane %v781, %v785
        %v804 = vunpack.c.l.b16 %v765
        %v805 = vunpack.c.l.b16 %v766
        %v806 = vunpack.c.l.b16 %v767
        %v807 = vunpack.c.l.b16 %v768
        %v808 = vunpack.c.l.b16 %v769
        %v809 = vunpack.c.l.b16 %v770
        %v810 = vunpack.c.l.b16 %v771
        %v811 = vunpack.c.l.b16 %v772
        %v812 = vunpack.c.l.b16 %v773
        %v813 = vunpack.c.l.b16 %v774
        %v814 = vunpack.c.l.b16 %v775
        %v815 = vunpack.c.l.b16 %v776
        %v816 = vunpack.c.l.b16 %v777
        %v817 = vunpack.c.l.b16 %v778
        %v818 = vunpack.c.l.b16 %v779
        %v819 = vunpack.c.l.b16 %v780
        %v820 = vpack.c.b16 %v805, %v804
        %v821 = vpack.c.b16 %v807, %v806
        %v822 = vpack.c.b16 %v809, %v808
        %v823 = vpack.c.b16 %v811, %v810
        %v824 = vpack.c.b16 %v813, %v812
        %v825 = vpack.c.b16 %v815, %v814
        %v826 = vpack.c.b16 %v817, %v816
        %v827 = vpack.c.b16 %v819, %v818
        %836 = vmatprep.subr.bf16.mxu0 0
        %837 = vmatpush1.bf16.msra.mxu0 %v827
        %838 = vmatprep.subr.bf16.mxu0 0
        %839 = vmatpush1.bf16.msra.mxu0 %v826
        %840 = vmatprep.subr.bf16.mxu0 0
        %841 = vmatpush1.bf16.msra.mxu0 %v825
        %842 = vmatprep.subr.bf16.mxu0 0
        %843 = vmatpush1.bf16.msra.mxu0 %v824
        %844 = vmatprep.subr.bf16.mxu0 0
        %845 = vmatpush1.bf16.msra.mxu0 %v823
        %846 = vmatprep.subr.bf16.mxu0 0
        %847 = vmatpush1.bf16.msra.mxu0 %v822
        %848 = vmatprep.subr.bf16.mxu0 0
        %849 = vmatpush1.bf16.msra.mxu0 %v821
        %850 = vmatprep.subr.bf16.mxu0 0
        %851 = vmatpush1.bf16.msra.mxu0 %v820
        %852 = vmatprep.subr.bf16.mxu0 0
        %853 = vmatpush2.bf16.msra.mxu0 0
        %854 = vmatprep.subr.bf16.mxu0 0
        %855 = vmatpush2.bf16.msra.mxu0 0
        %856 = vmatprep.subr.bf16.mxu0 0
        %857 = vmatpush2.bf16.msra.mxu0 0
        %858 = vmatprep.subr.bf16.mxu0 0
        %859 = vmatpush2.bf16.msra.mxu0 0
        %860 = vmatprep.subr.bf16.mxu0 0
        %861 = vmatpush2.bf16.msra.mxu0 0
        %862 = vmatprep.subr.bf16.mxu0 0
        %863 = vmatpush2.bf16.msra.mxu0 0
        %864 = vmatprep.subr.bf16.mxu0 0
        %865 = vmatpush2.bf16.msra.mxu0 0
        %866 = vmatprep.subr.bf16.mxu0 0
        %867 = vmatpush2.bf16.msra.mxu0 0
        %868 = vmatprep.mubr.bf16.mxu0 0
        %869 = vmatmul.mubr.bf16.gmra.mxu0 %v764
        %v870 = vpop.f32.mrf.mxu0
        %v871 = vadd.f32 %v786, %v870
        %v872 = vpop.f32.mrf.mxu0
        %v873 = vpop.f32.mrf.mxu0
        %v874 = vpop.f32.mrf.mxu0
        %875 = vdwg.mxu0
        %v876 = vmul.f32 %v871, %v515
        %877 = vadd.xlane.f32.xlu0 %v876
        %v878 = vpop.xlane.xlu0 %877
        %v879 = vmul.f32 %v878, 0.03125
        %v880 = vsub.f32 %v876, %v879
        %v881 = vsel %vm587, %v880, 0.0
        %v882 = vmul.f32 %v881, %v881
        %883 = vadd.xlane.f32.xlu0 %v882
        %v884 = vpop.xlane.xlu0 %883
        %v885 = vmul.f32 %v884, 0.03125
        %v886 = vadd.f32 %v885, 1e-05
        %v887 = vrsqrt.pop %v886
        %v888 = vmul.f32 %v881, %v887
        %v889 = vld [vmem:[%s12] sm:$0x1]
        %v891 = vlaneseq
        %v892 = vshrl.u32 %v891, 7
        %v893 = vsub.s32 0, %v892
        %v894 = vrot.slane %v889, %v893
        %v896 = vmul.f32 %v888, %v894
        %v897 = vld [vmem:[%s13] sm:$0x1]
        %v899 = vlaneseq
        %v900 = vshrl.u32 %v899, 7
        %v901 = vsub.s32 0, %v900
        %v902 = vrot.slane %v897, %v901
        %v904 = vadd.f32 %v896, %v902
        %v905 = vmul.f32 %v904, 0.5
        %v906 = vtanh.pop %v905
        %v907 = vmul.f32 %v906, 0.5
        %v908 = vadd.f32 %v907, 0.5
        %909 = vst [vmem:[%s509] sm:$0xff] %v908
        %p910 = scmp.lt.s32.totalorder %s27, 1
        %s911 = scalar_select %p910, %s27, 1
        %s912 = smul.addr %s911, 8
        %s913 = scalar_lea.vmem %s14, %s912
        // Predicated region
        $region85: #{mlp_0_forward.1} parent=75 // pred_check
          %p914 = pneg %p349
        $region86: #{mlp_0_forward.1} parent=75 // pred_check_branch
          %916 = sbr.rel (%p914) target = $region88
        $region87: #{mlp_0_forward.1} parent=75 // pred_region
          _
        $region88: #{mlp_0_forward.1} parent=75 // pred_fallthru
          _
      $region76: #{mlp_0_forward.1} parent=5 // pred_fallthru
        _
      %p917 = scmp.le.s32.totalorder 2, %s22
      // Predicated region
      $region89: #{mlp_0_forward.1} parent=5 // pred_check
        %p918 = pneg %p917
      $region90: #{mlp_0_forward.1} parent=5 // pred_check_branch
        %920 = sbr.rel (%p918) target = $region92
      $region91: #{mlp_0_forward.1} parent=5 // pred_region
        %s921 = ssub.s32 %s22, 2
        // Predicated region
        $region93: #{mlp_0_forward.1} parent=91 // pred_check
          %p922 = pneg %p355
        $region94: #{mlp_0_forward.1} parent=91 // pred_check_branch
          %924 = sbr.rel (%p922) target = $region96
        $region95: #{mlp_0_forward.1} parent=91 // pred_region
          %p925 = scmp.lt.s32.totalorder %s28, 1
          %s926 = scalar_select %p925, %s28, 1
          %s927 = smul.addr %s926, 8
          %s928 = scalar_lea.vmem %s14, %s927
        $region96: #{mlp_0_forward.1} parent=91 // pred_fallthru
          _
      $region92: #{mlp_0_forward.1} parent=5 // pred_fallthru
        _
    $region6: #{mlp_0_forward.1} parent=1 // loop_footer
      %s26 = sadd.s32 1, %s22
    $region7: #{mlp_0_forward.1} parent=1 // loop_footer_branch
      %21 = sbr.rel target = $region3
    $region8: #{mlp_0_forward.1} parent=1 // loop_exit
      _
    %929 = vsyncpa [#allocation3], 1
    %s930 = scalar_lea.sflag [#allocation3], 1
    %931 = vsyncpa %s930, 1
    %932 = vsyncpa [#allocation5], 1

</llo_original>
